<compile_context>
chip_gen: v6e
topology: v6e:2x2x1
jax: 0.10.0
libtpu: 0.0.40
codegen_flags: <defaults>
</compile_context>

<pallas_src>
import functools

import jax
import jax.numpy as jnp
from jax.experimental import pallas as pl
from jax.experimental.pallas import tpu as pltpu


def _round_up(x: int, m: int) -> int:
    return ((x + m - 1) // m) * m


def _pick_tile(dim: int, align: int, cap: int) -> int:
    """Largest multiple of `align` that divides `dim` and is <= cap (>= align)."""
    best = align
    t = align
    limit = min(dim, max(cap, align))
    while t <= limit:
        if dim % t == 0:
            best = t
        t += align
    return best


def _vmem_budget_bytes() -> int:
    """Working-set budget, gated on the chip generation's VMEM capacity."""
    try:
        cap = int(pltpu.get_tpu_info().vmem_capacity_bytes)
    except Exception:
        cap = 64 * 1024 * 1024          # conservative fallback: v7x per-TC VMEM
    # ~48 MiB on v7x (64 MiB VMEM), ~96 MiB on v5e/v6e (128 MiB VMEM).
    return min((cap * 3) // 4, 100 * 1024 * 1024)


def _linear_kernel(x_ref, w_ref, o_ref, acc_ref):
    """acc[i, j] += x_tile @ w_tile   (weight pre-stored as (v_size, c_size))."""

    @pl.when(pl.program_id(2) == 0)
    def _init():
        acc_ref[...] = jnp.zeros_like(acc_ref)

    # Standard row-major contraction on the MXU; weight already lives in
    # (v_size, c_size) layout so no transpose is ever emitted.
    acc_ref[...] += jnp.dot(
        x_ref[...], w_ref[...], preferred_element_type=jnp.float32
    )

    @pl.when(pl.program_id(2) == pl.num_programs(2) - 1)
    def _finalize():
        o_ref[...] = acc_ref[...].astype(o_ref.dtype)


def prepare_weight(weight):
    """One-time parameter prep (run at init, NOT per forward call).

    Takes the PyTorch-layout weight (c_size, v_size), transposes it to the
    MXU-natural (v_size, c_size) layout and zero-pads both dims to 128.
    """
    c_size, v_size = weight.shape
    vp, cp = _round_up(v_size, 128), _round_up(c_size, 128)
    w = weight.T
    if (vp, cp) != (v_size, c_size):
        w = jnp.pad(w, ((0, vp - v_size), (0, cp - c_size)))
    return w


@functools.partial(jax.jit, static_argnames=("c_size",))
def perceptron_forward(x, w_prepared, *, c_size):
    """x: (B, v_size), w_prepared: (Vp, Cp) from prepare_weight -> (B, c_size)."""
    B, v_size = x.shape
    Vp, Cp = w_prepared.shape
    assert Vp == _round_up(v_size, 128), "w_prepared does not match x's feature dim"
    assert Cp >= c_size

    x_isz = jnp.dtype(x.dtype).itemsize
    w_isz = jnp.dtype(w_prepared.dtype).itemsize
    out_dtype = x.dtype
    out_isz = jnp.dtype(out_dtype).itemsize

    # Batch padded only to the sublane-packing minimum (16 rows for 16-bit dtypes).
    m_align = 16 if x_isz < 4 else 8
    Bp = _round_up(B, m_align)

    # ---- tile selection: divisors of padded dims, VMEM-budget gated ---------
    budget = _vmem_budget_bytes()
    tm_cap, tn_cap, tk_cap = 512, 2048, 2048
    while True:
        tm = _pick_tile(Bp, m_align, tm_cap)
        tn = _pick_tile(Cp, 128, tn_cap)
        tk = _pick_tile(Vp, 128, tk_cap)
        need = (2 * tm * tk * x_isz        # double-buffered x tiles
                + 3 * tn * tk * w_isz      # up-to-triple-buffered weight tiles
                + 2 * tm * tn * out_isz    # double-buffered output tiles
                + tm * tn * 4)             # f32 accumulator scratch
        if need <= budget or (tm_cap <= m_align and tn_cap <= 128 and tk_cap <= 128):
            break
        if tk_cap >= tn_cap and tk_cap > 128:
            tk_cap //= 2
        elif tn_cap > 128:
            tn_cap //= 2
        else:
            tm_cap = max(tm_cap // 2, m_align)

    # Megacore: guarantee >= 2 blocks along a "parallel" axis so both v7x
    # TensorCores get work (neutral on single-TC v5e/v6e).
    if Bp // tm == 1 and Cp // tn == 1 and Cp >= 256:
        tn = _pick_tile(Cp, 128, max(Cp // 2, 128))

    # ---- pad x only to hardware minimums (zeros are matmul-neutral) ---------
    if (Bp, Vp) != (B, v_size):
        x = jnp.pad(x, ((0, Bp - B), (0, Vp - v_size)))

    grid = (Bp // tm, Cp // tn, Vp // tk)     # reduction (v_size) axis LAST
    n_weight_tiles = grid[1] * grid[2]

    # Deeper buffering on the bandwidth-critical (streamed) weight operand.
    w_spec_kwargs = {}
    if n_weight_tiles >= 3:
        w_spec_kwargs["pipeline_mode"] = pl.Buffered(3)

    cost = pl.CostEstimate(
        flops=2 * Bp * Vp * Cp,
        transcendentals=0,
        bytes_accessed=(grid[0] * Cp * Vp * w_isz     # weight re-streamed per i
                        + grid[1] * Bp * Vp * x_isz   # x re-streamed per j
                        + Bp * Cp * out_isz),
    )

    out = pl.pallas_call(
        _linear_kernel,
        out_shape=jax.ShapeDtypeStruct((Bp, Cp), out_dtype),
        grid_spec=pltpu.PrefetchScalarGridSpec(
            num_scalar_prefetch=0,
            grid=grid,
            in_specs=[
                # x tile reused across the c_size axis (the weight is streamed).
                pl.BlockSpec((tm, tk), lambda i, j, k: (i, k)),
                # weight streamed in its prepared (v_size, c_size) layout.
                pl.BlockSpec((tk, tn), lambda i, j, k: (k, j), **w_spec_kwargs),
            ],
            out_specs=pl.BlockSpec((tm, tn), lambda i, j, k: (i, j)),
            scratch_shapes=[pltpu.VMEM((tm, tn), jnp.float32)],
        ),
        compiler_params=pltpu.CompilerParams(
            dimension_semantics=("parallel", "parallel", "arbitrary"),
            vmem_limit_bytes=int(budget),
        ),
        cost_estimate=cost,
    )(x, w_prepared)

    return out[:B, :c_size]


def xavier_normal(key, c_size, v_size, dtype=jnp.float32):
    # Matches torch.nn.init.xavier_normal_ for a (c_size, v_size) weight:
    # std = sqrt(2 / (fan_in + fan_out)) = sqrt(2 / (v_size + c_size))
    std = (2.0 / (v_size + c_size)) ** 0.5
    return (jax.random.normal(key, (c_size, v_size)) * std).astype(dtype)


if __name__ == "__main__":
    key = jax.random.PRNGKey(0)
    kx, kw, kx2, kw2 = jax.random.split(key, 4)

    # --- tiny case (module-default-style shapes) -----------------------------
    batch, v_size, c_size = 8, 32, 16
    x = jax.random.normal(kx, (batch, v_size), dtype=jnp.float32)
    weight = xavier_normal(kw, c_size, v_size)           # PyTorch (c, v) layout
    w_prep = prepare_weight(weight)                      # one-time pad + relayout
    out = jax.block_until_ready(perceptron_forward(x, w_prep, c_size=c_size))

    ref = x @ weight.T
    assert out.shape == (batch, c_size)
    assert out.dtype == x.dtype
    # MXU f32 goes through multi-pass bf16 emulation; tolerance sized accordingly.
    assert jnp.allclose(out, ref, atol=2e-2, rtol=2e-2)

    # --- moderate bf16 case: exercises multi-tile grid, megacore split along
    # --- c_size, and the Buffered(3) weight-streaming path --------------------
    batch2, v2, c2 = 256, 512, 384
    x2 = jax.random.normal(kx2, (batch2, v2)).astype(jnp.bfloat16)
    w2 = xavier_normal(kw2, c2, v2, dtype=jnp.bfloat16)
    w2_prep = prepare_weight(w2)
    out2 = jax.block_until_ready(perceptron_forward(x2, w2_prep, c_size=c2))

    ref2 = x2.astype(jnp.float32) @ w2.astype(jnp.float32).T
    assert out2.shape == (batch2, c2)
    assert out2.dtype == jnp.bfloat16
    assert jnp.allclose(out2.astype(jnp.float32), ref2, atol=5e-2, rtol=5e-2)

    print("KERNEL_OK")
</pallas_src>

<mosaic_0001>
module attributes {stable_mosaic.version = 11 : i64} {
  func.func @_linear_kernel(%arg0: i32, %arg1: i32, %arg2: i32, %arg3: memref<8x128xf32, #tpu.memory_space<vmem>>, %arg4: memref<128x128xf32, #tpu.memory_space<vmem>>, %arg5: memref<8x128xf32, #tpu.memory_space<vmem>>, %arg6: memref<8x128xf32, #tpu.memory_space<vmem>>) attributes {dimension_semantics = [#tpu.dimension_semantics<parallel>, #tpu.dimension_semantics<parallel>, #tpu.dimension_semantics<arbitrary>], iteration_bounds = array<i64: 1, 1, 1>, scalar_prefetch = 0 : i64, scratch_operands = 1 : i64, tpu.core_type = #tpu.core_type<tc>, window_params = [{transform_indices = @transform_0, window_bounds = array<i64: 8, 128>}, {transform_indices = @transform_1, window_bounds = array<i64: 128, 128>}, {transform_indices = @transform_2, window_bounds = array<i64: 8, 128>}]} {
    %c0_i32 = arith.constant 0 : i32
    %0 = arith.cmpi eq, %arg2, %c0_i32 : i32
    %1 = arith.extui %0 : i1 to i32
    %c0_i32_0 = arith.constant 0 : i32
    %2 = arith.cmpi ne, %1, %c0_i32_0 : i32
    scf.if %2 {
      %cst_10 = arith.constant 0.000000e+00 : f32
      %12 = vector.broadcast %cst_10 : f32 to vector<8x128xf32>
      %c0_11 = arith.constant 0 : index
      %c0_12 = arith.constant 0 : index
      %13 = vector.load %arg6[%c0_11, %c0_12] : memref<8x128xf32, #tpu.memory_space<vmem>>, vector<8x128xf32>
      tpu.vector_store %arg6[%c0_11, %c0_12], %12 {strides = array<i32>} : memref<8x128xf32, #tpu.memory_space<vmem>>, vector<8x128xf32>,
    } else {
    }
    %c0 = arith.constant 0 : index
    %c0_1 = arith.constant 0 : index
    %3 = vector.load %arg6[%c0, %c0_1] : memref<8x128xf32, #tpu.memory_space<vmem>>, vector<8x128xf32>
    %c0_2 = arith.constant 0 : index
    %c0_3 = arith.constant 0 : index
    %4 = vector.load %arg3[%c0_2, %c0_3] : memref<8x128xf32, #tpu.memory_space<vmem>>, vector<8x128xf32>
    %c0_4 = arith.constant 0 : index
    %c0_5 = arith.constant 0 : index
    %5 = vector.load %arg4[%c0_4, %c0_5] : memref<128x128xf32, #tpu.memory_space<vmem>>, vector<128x128xf32>
    %cst = arith.constant dense<0.000000e+00> : vector<8x128xf32>
    %6 = tpu.matmul %4, %5, %cst {dimension_numbers = #tpu.dot_dimension_numbers<[1], [0], [0], [1], [0, 0, 1, 1], [], []>} : vector<8x128xf32>, vector<128x128xf32>, vector<8x128xf32> -> vector<8x128xf32>
    %7 = arith.addf %3, %6 : vector<8x128xf32>
    %c0_6 = arith.constant 0 : index
    %c0_7 = arith.constant 0 : index
    %8 = vector.load %arg6[%c0_6, %c0_7] : memref<8x128xf32, #tpu.memory_space<vmem>>, vector<8x128xf32>
    tpu.vector_store %arg6[%c0_6, %c0_7], %7 {strides = array<i32>} : memref<8x128xf32, #tpu.memory_space<vmem>>, vector<8x128xf32>,
    %c0_i32_8 = arith.constant 0 : i32
    %9 = arith.cmpi eq, %arg2, %c0_i32_8 : i32
    %10 = arith.extui %9 : i1 to i32
    %c0_i32_9 = arith.constant 0 : i32
    %11 = arith.cmpi ne, %10, %c0_i32_9 : i32
    scf.if %11 {
      %c0_10 = arith.constant 0 : index
      %c0_11 = arith.constant 0 : index
      %12 = vector.load %arg6[%c0_10, %c0_11] : memref<8x128xf32, #tpu.memory_space<vmem>>, vector<8x128xf32>
      %c0_12 = arith.constant 0 : index
      %c0_13 = arith.constant 0 : index
      %13 = vector.load %arg5[%c0_12, %c0_13] : memref<8x128xf32, #tpu.memory_space<vmem>>, vector<8x128xf32>
      tpu.vector_store %arg5[%c0_12, %c0_13], %12 {strides = array<i32>} : memref<8x128xf32, #tpu.memory_space<vmem>>, vector<8x128xf32>,
    } else {
    }
    return
  }
  func.func @transform_0(%arg0: i32, %arg1: i32, %arg2: i32) -> (i32, i32) {
    %c0_i32 = arith.constant 0 : i32
    return %arg0, %arg2 : i32, i32
  }
  func.func @transform_1(%arg0: i32, %arg1: i32, %arg2: i32) -> (i32, i32) {
    %c0_i32 = arith.constant 0 : i32
    return %arg2, %arg1 : i32, i32
  }
  func.func @transform_2(%arg0: i32, %arg1: i32, %arg2: i32) -> (i32, i32) {
    %c0_i32 = arith.constant 0 : i32
    return %arg0, %arg1 : i32, i32
  }
}

</mosaic_0001>

<llo_original>
// kernel: perceptron_forward.1
$region0: #{perceptron_forward.1}
  #allocation0 [shape = 'u32[]', space=smem, size = 0x4, offset = 0x4, fixed_abs, tag = 'smem constant byte address 0x4 - core index']
  #allocation1 [shape = 'u32[144,128]{1,0:T(1,128)}', space=vmem, size = 0x12000, scoped, tag = 'internal scratch']
  #allocation2 [shape = 'f32[8,128]{1,0:T(8,128)}', space=vmem, size = 0x1000, scoped, tag = 'scratch operand']
  %s0 = inlined_call_operand.vmem [shape: f32[8,128], index: 0, kind: input, shape index: {}]
  %s1 = inlined_call_operand.hbm [shape: f32[128,128], index: 1, kind: input, shape index: {}]
  %s2 = inlined_call_operand.hbm [shape: f32[8,128], index: 2, kind: output, shape index: {}]
  %s3 = sld [smem:[#allocation0]]
  $region30: #{perceptron_forward.1} parent=0
    _
  %s5 = ssub.s32 1, %s3
  %s6 = scalar_select 0, %s5, %s3
  $region1: #{perceptron_forward.1} parent=0
    #allocation3 [shape = 'u8[65536]{0}', space=vmem, size = 0x10000, scoped, tag = 'input window, operand 1, single buffered']
    #allocation4 [shape = 's32[1]{0}', space=sflag, size = 0x4, scoped, tag = 'scoped memory for perceptron_forward.1']
    #allocation5 [shape = 's32[1]{0}', space=sflag, size = 0x4, scoped, tag = 'scoped memory for perceptron_forward.1']
    #allocation6 [shape = 'u8[4096]{0}', space=vmem, size = 0x1000, scoped, tag = 'output window, operand 0, single buffered']
    %7 = vsyncpa [#allocation4], 0
    %8 = vsyncpa [#allocation5], 0
    // Predicated region
    $region2: #{perceptron_forward.1} parent=1 // pred_check
      _
    $region3: #{perceptron_forward.1} parent=1 // pred_check_branch
      %10 = sbr.rel (0) target = $region5
    $region4: #{perceptron_forward.1} parent=1 // pred_region
      _
    $region5: #{perceptron_forward.1} parent=1 // pred_fallthru
      _
    // Predicated region
    $region6: #{perceptron_forward.1} parent=1 // pred_check
      _
    $region7: #{perceptron_forward.1} parent=1 // pred_check_branch
      %12 = sbr.rel (0) target = $region9
    $region8: #{perceptron_forward.1} parent=1 // pred_region
      %s14 = ssub.s32 2048, 2048
      %15 = vsyncadd [#allocation4], %s14
      %s16 = sshll.u32 [#allocation3], 4
      %s17 = int_to_ptr.vmem [resolvable:$true] %s16
      %22 = dma.hbm_to_vmem [thread:$0]  %s1, 2048, %s17, [#allocation4], 128, 128, 8
    $region9: #{perceptron_forward.1} parent=1 // pred_fallthru
      _
    // Predicated region
    $region10: #{perceptron_forward.1} parent=1 // pred_check
      _
    $region11: #{perceptron_forward.1} parent=1 // pred_check_branch
      %24 = sbr.rel (0) target = $region13
    $region12: #{perceptron_forward.1} parent=1 // pred_region
      %25 = dma.done [#allocation4], 2048
    $region13: #{perceptron_forward.1} parent=1 // pred_fallthru
      _
    %p26 = scmp.eq.s32.totalorder 0, 0
    // Predicated region
    $region14: #{perceptron_forward.1} parent=1 // pred_check
      %p27 = pneg %p26
    $region15: #{perceptron_forward.1} parent=1 // pred_check_branch
      %29 = sbr.rel (%p27) target = $region17
    $region16: #{perceptron_forward.1} parent=1 // pred_region
      %30 = vst [vmem:[#allocation2] sm:$0xff] 0.0
    $region17: #{perceptron_forward.1} parent=1 // pred_fallthru
      _
    %v31 = vld [vmem:[#allocation2] sm:$0xff]
    %v32 = vld [vmem:[%s0] sm:$0xff]
    %v33 = vld [vmem:[#allocation3] sm:$0xff]
    %v34 = vld [vmem:[#allocation3 + $0x8] sm:$0xff]
    %v35 = vld [vmem:[#allocation3 + $0x10] sm:$0xff]
    %v36 = vld [vmem:[#allocation3 + $0x18] sm:$0xff]
    %v37 = vld [vmem:[#allocation3 + $0x20] sm:$0xff]
    %v38 = vld [vmem:[#allocation3 + $0x28] sm:$0xff]
    %v39 = vld [vmem:[#allocation3 + $0x30] sm:$0xff]
    %v40 = vld [vmem:[#allocation3 + $0x38] sm:$0xff]
    %v41 = vld [vmem:[#allocation3 + $0x40] sm:$0xff]
    %v42 = vld [vmem:[#allocation3 + $0x48] sm:$0xff]
    %v43 = vld [vmem:[#allocation3 + $0x50] sm:$0xff]
    %v44 = vld [vmem:[#allocation3 + $0x58] sm:$0xff]
    %v45 = vld [vmem:[#allocation3 + $0x60] sm:$0xff]
    %v46 = vld [vmem:[#allocation3 + $0x68] sm:$0xff]
    %v47 = vld [vmem:[#allocation3 + $0x70] sm:$0xff]
    %v48 = vld [vmem:[#allocation3 + $0x78] sm:$0xff]
    %49 = vmatprep.subr.mxu0 0.0
    %50 = vmatpush1.msra.mxu0 %v48
    %51 = vmatprep.subr.mxu0 0.0
    %52 = vmatpush1.msra.mxu0 %v47
    %53 = vmatprep.subr.mxu0 0.0
    %54 = vmatpush1.msra.mxu0 %v46
    %55 = vmatprep.subr.mxu0 0.0
    %56 = vmatpush1.msra.mxu0 %v45
    %57 = vmatprep.subr.mxu0 0.0
    %58 = vmatpush1.msra.mxu0 %v44
    %59 = vmatprep.subr.mxu0 0.0
    %60 = vmatpush1.msra.mxu0 %v43
    %61 = vmatprep.subr.mxu0 0.0
    %62 = vmatpush1.msra.mxu0 %v42
    %63 = vmatprep.subr.mxu0 0.0
    %64 = vmatpush1.msra.mxu0 %v41
    %65 = vmatprep.subr.mxu0 0.0
    %66 = vmatpush1.msra.mxu0 %v40
    %67 = vmatprep.subr.mxu0 0.0
    %68 = vmatpush1.msra.mxu0 %v39
    %69 = vmatprep.subr.mxu0 0.0
    %70 = vmatpush1.msra.mxu0 %v38
    %71 = vmatprep.subr.mxu0 0.0
    %72 = vmatpush1.msra.mxu0 %v37
    %73 = vmatprep.subr.mxu0 0.0
    %74 = vmatpush1.msra.mxu0 %v36
    %75 = vmatprep.subr.mxu0 0.0
    %76 = vmatpush1.msra.mxu0 %v35
    %77 = vmatprep.subr.mxu0 0.0
    %78 = vmatpush1.msra.mxu0 %v34
    %79 = vmatprep.subr.mxu0 0.0
    %80 = vmatpush1.msra.mxu0 %v33
    %81 = vmatprep.subr.mxu0 0.0
    %82 = vmatpush2.msra.mxu0 0.0
    %83 = vmatprep.subr.mxu0 0.0
    %84 = vmatpush2.msra.mxu0 0.0
    %85 = vmatprep.subr.mxu0 0.0
    %86 = vmatpush2.msra.mxu0 0.0
    %87 = vmatprep.subr.mxu0 0.0
    %88 = vmatpush2.msra.mxu0 0.0
    %89 = vmatprep.subr.mxu0 0.0
    %90 = vmatpush2.msra.mxu0 0.0
    %91 = vmatprep.subr.mxu0 0.0
    %92 = vmatpush2.msra.mxu0 0.0
    %93 = vmatprep.subr.mxu0 0.0
    %94 = vmatpush2.msra.mxu0 0.0
    %95 = vmatprep.subr.mxu0 0.0
    %96 = vmatpush2.msra.mxu0 0.0
    %97 = vmatprep.subr.mxu0 0.0
    %98 = vmatpush2.msra.mxu0 0.0
    %99 = vmatprep.subr.mxu0 0.0
    %100 = vmatpush2.msra.mxu0 0.0
    %101 = vmatprep.subr.mxu0 0.0
    %102 = vmatpush2.msra.mxu0 0.0
    %103 = vmatprep.subr.mxu0 0.0
    %104 = vmatpush2.msra.mxu0 0.0
    %105 = vmatprep.subr.mxu0 0.0
    %106 = vmatpush2.msra.mxu0 0.0
    %107 = vmatprep.subr.mxu0 0.0
    %108 = vmatpush2.msra.mxu0 0.0
    %109 = vmatprep.subr.mxu0 0.0
    %110 = vmatpush2.msra.mxu0 0.0
    %111 = vmatprep.subr.mxu0 0.0
    %112 = vmatpush2.msra.mxu0 0.0
    %113 = vmatprep.mubr.f32.mxu0 0.0
    %114 = vmatmul.mubr.f32.gmra.mxu0 %v32
    %v115 = vpop.f32.mrf.mxu0
    %v116 = vadd.f32 0.0, %v115
    %v117 = vpop.f32.mrf.mxu0
    %118 = vdwg.mxu0
    %v119 = vadd.f32 %v31, %v116
    %120 = vst [vmem:[#allocation2] sm:$0xff] %v119
    // Predicated region
    $region18: #{perceptron_forward.1} parent=1 // pred_check
      %p121 = pneg %p26
    $region19: #{perceptron_forward.1} parent=1 // pred_check_branch
      %123 = sbr.rel (%p121) target = $region21
    $region20: #{perceptron_forward.1} parent=1 // pred_region
      %v124 = vld [vmem:[#allocation2] sm:$0xff]
      %125 = vst [vmem:[#allocation6] sm:$0xff] %v124
    $region21: #{perceptron_forward.1} parent=1 // pred_fallthru
      _
    // Predicated region
    $region22: #{perceptron_forward.1} parent=1 // pred_check
      _
    $region23: #{perceptron_forward.1} parent=1 // pred_check_branch
      %127 = sbr.rel (0) target = $region25
    $region24: #{perceptron_forward.1} parent=1 // pred_region
      %s129 = ssub.s32 128, 128
      %130 = vsyncadd [#allocation5], %s129
      %s132 = sshll.u32 [#allocation6], 4
      %s133 = int_to_ptr.vmem [resolvable:$true] %s132
      %135 = dma.vmem_to_hbm [thread:$0]  %s133, 128, %s2, [#allocation5]
    $region25: #{perceptron_forward.1} parent=1 // pred_fallthru
      _
    // Predicated region
    $region26: #{perceptron_forward.1} parent=1 // pred_check
      _
    $region27: #{perceptron_forward.1} parent=1 // pred_check_branch
      %137 = sbr.rel (0) target = $region29
    $region28: #{perceptron_forward.1} parent=1 // pred_region
      %138 = dma.done [#allocation5], 128
    $region29: #{perceptron_forward.1} parent=1 // pred_fallthru
      _
    %139 = vsyncpa [#allocation4], 1
    %140 = vsyncpa [#allocation5], 1

</llo_original>
